<compile_context>
chip_gen: v7x
topology: tpu7x:2x2x1
jax: 0.10.0
libtpu: 0.0.40
codegen_flags: <defaults>
</compile_context>

<pallas_src>
import functools

import jax
import jax.numpy as jnp
from jax import lax
from jax.experimental import pallas as pl
from jax.experimental.pallas import tpu as pltpu


# ---------------------------------------------------------------------------
# Pallas kernel: y = ((x - mean_C) / sqrt(var_C + eps) * weight + bias) * v
# operating on (1, C, T) tiles; the LayerNorm reduction is over the channel
# (sublane) axis, the spatial axis stays lane-dense.
# ---------------------------------------------------------------------------

def _ln_mul_kernel(x_ref, v_ref, w_ref, b_ref, o_ref, *, c, eps):
    x = x_ref[...].astype(jnp.float32)                       # (1, C, T)
    inv_c = 1.0 / c
    mean = jnp.sum(x, axis=1, keepdims=True) * inv_c         # (1, 1, T)
    xc = x - mean
    var = jnp.sum(xc * xc, axis=1, keepdims=True) * inv_c    # (1, 1, T)
    y = xc * lax.rsqrt(var + eps)
    y = y * w_ref[...].astype(jnp.float32) + b_ref[...].astype(jnp.float32)
    y = y * v_ref[...].astype(jnp.float32)
    o_ref[...] = y.astype(o_ref.dtype)


# ---------------------------------------------------------------------------
# Wrapper: tiling decisions
# ---------------------------------------------------------------------------

_MAX_TILE_BYTES = 1 << 20             # per-stream tile cap; 3 double-buffered
                                      # streams + f32 temps stay well under
                                      # v7x's 64 MiB VMEM.
_VMEM_LIMIT_BYTES = 32 * 1024 * 1024  # >= scoped defaults on v5e/v6e/v7x,
                                      # <= physical VMEM on every generation.


def _pick_spatial_tile(hw, c, itemsize, batch):
    """Pick a lane-axis tile (multiple of 128 or the full extent)."""
    cap = max(128, (_MAX_TILE_BYTES // max(1, c * itemsize)) // 128 * 128)
    t = hw if hw <= cap else cap
    # Keep >= 2 total grid steps when possible so the "parallel" axes can
    # shard across the 2 TensorCores on v7x (harmless on v5e/v6e).
    if batch * pl.cdiv(hw, t) < 2 and hw > 256:
        t = max(128, pl.cdiv(pl.cdiv(hw, 2), 128) * 128)
    return t


def fused_layernorm_mul_nchw(x, v, weight, bias, *, eps=1e-5):
    """Computes v * WithBias_LayerNorm(x) over the channel dim, NCHW layout.

    x, v: (B, C, H, W);  weight, bias: (C,).  Matches PyTorch
    WithBias_LayerNorm (unbiased=False variance) applied over channels per
    spatial position, followed by the elementwise multiply with v.
    """
    B, C, H, W = x.shape
    hw = H * W
    x3 = x.reshape(B, C, hw)          # free reshape (contiguous)
    v3 = v.reshape(B, C, hw)
    out_dtype = x.dtype
    itemsize = jnp.dtype(out_dtype).itemsize

    t = _pick_spatial_tile(hw, C, itemsize, B)
    grid = (B, pl.cdiv(hw, t))

    w3 = weight.reshape(1, C, 1).astype(jnp.float32)
    b3 = bias.reshape(1, C, 1).astype(jnp.float32)

    out = pl.pallas_call(
        functools.partial(_ln_mul_kernel, c=C, eps=eps),
        out_shape=jax.ShapeDtypeStruct((B, C, hw), out_dtype),
        grid=grid,
        in_specs=[
            pl.BlockSpec((1, C, t), lambda b, i: (b, 0, i)),
            pl.BlockSpec((1, C, t), lambda b, i: (b, 0, i)),
            pl.BlockSpec((1, C, 1), lambda b, i: (0, 0, 0)),
            pl.BlockSpec((1, C, 1), lambda b, i: (0, 0, 0)),
        ],
        out_specs=pl.BlockSpec((1, C, t), lambda b, i: (b, 0, i)),
        compiler_params=pltpu.CompilerParams(
            dimension_semantics=("parallel", "parallel"),
            vmem_limit_bytes=_VMEM_LIMIT_BYTES,
        ),
    )(x3, v3, w3, b3)
    return out.reshape(B, C, H, W)


# ---------------------------------------------------------------------------
# FSAS forward (convs / FFT via XLA, LayerNorm*v via Pallas)
# ---------------------------------------------------------------------------

def _conv1x1(x, w, b=None):
    y = lax.conv_general_dilated(
        x, w, window_strides=(1, 1), padding="VALID",
        dimension_numbers=("NCHW", "OIHW", "NCHW"))
    if b is not None:
        y = y + b.reshape(1, -1, 1, 1)
    return y


def _dwconv3x3(x, w, b=None):
    y = lax.conv_general_dilated(
        x, w, window_strides=(1, 1), padding=((1, 1), (1, 1)),
        dimension_numbers=("NCHW", "OIHW", "NCHW"),
        feature_group_count=x.shape[1])
    if b is not None:
        y = y + b.reshape(1, -1, 1, 1)
    return y


def _to_3d(x):                       # b c h w -> b (h w) c   (ref path only)
    b, c, h, w = x.shape
    return x.transpose(0, 2, 3, 1).reshape(b, h * w, c)


def _to_4d(x, h, w):                 # b (h w) c -> b c h w   (ref path only)
    b, hw, c = x.shape
    return x.reshape(b, h, w, c).transpose(0, 3, 1, 2)


def _patchify(x, p):                 # b c (h p1) (w p2) -> b c h w p1 p2
    b, c, h, w = x.shape
    x = x.reshape(b, c, h // p, p, w // p, p)
    return x.transpose(0, 1, 2, 4, 3, 5)


def _unpatchify(x, p):               # b c h w p1 p2 -> b c (h p1) (w p2)
    b, c, hp, wp, _, _ = x.shape
    x = x.transpose(0, 1, 2, 4, 3, 5)
    return x.reshape(b, c, hp * p, wp * p)


def _layernorm_ref(x, weight, bias, eps):
    mu = jnp.mean(x, axis=-1, keepdims=True)
    var = jnp.mean((x - mu) ** 2, axis=-1, keepdims=True)
    return (x - mu) / jnp.sqrt(var + eps) * weight + bias


def fsas_forward(x, params, *, patch_size=4, eps=1e-5, use_pallas=True):
    """JAX port of FSAS.forward (bias=False convs)."""
    # TODO(synk): the 1x1 / depthwise-3x3 convs and the 4x4 rfft2/irfft2 are
    # left to XLA (lax.conv / jnp.fft); only the WithBias_LayerNorm * v stage
    # is a hand-written Pallas kernel.
    hidden = _conv1x1(x, params["to_hidden_w"], params.get("to_hidden_b"))
    hidden = _dwconv3x3(hidden, params["to_hidden_dw_w"],
                        params.get("to_hidden_dw_b"))
    q, k, v = jnp.split(hidden, 3, axis=1)

    qp = _patchify(q, patch_size).astype(jnp.float32)
    kp = _patchify(k, patch_size).astype(jnp.float32)
    out = jnp.fft.irfft2(jnp.fft.rfft2(qp) * jnp.fft.rfft2(kp),
                         s=(patch_size, patch_size))
    out = _unpatchify(out, patch_size)            # (B, 2*dim, H, W), float32

    v_f = v.astype(out.dtype)
    if use_pallas:
        y = fused_layernorm_mul_nchw(out, v_f, params["ln_w"], params["ln_b"],
                                     eps=eps)
    else:
        h, w = x.shape[-2:]
        out3 = _to_3d(out)
        y3 = _to_3d(v_f) * _layernorm_ref(out3, params["ln_w"],
                                          params["ln_b"], eps)
        y = _to_4d(y3, h, w)
    y = y.astype(x.dtype)

    return _conv1x1(y, params["project_out_w"], params.get("project_out_b"))


def _make_params(key, dim):
    ks = jax.random.split(key, 3)
    return {
        "to_hidden_w": 0.1 * jax.random.normal(
            ks[0], (dim * 6, dim, 1, 1), jnp.float32),
        "to_hidden_dw_w": 0.1 * jax.random.normal(
            ks[1], (dim * 6, 1, 3, 3), jnp.float32),
        "project_out_w": 0.1 * jax.random.normal(
            ks[2], (dim, dim * 2, 1, 1), jnp.float32),
        # LayerNorm params (ones / zeros, slightly perturbed so the affine
        # path is exercised).
        "ln_w": jnp.ones((dim * 2,), jnp.float32)
                + 0.01 * jnp.arange(dim * 2, dtype=jnp.float32),
        "ln_b": jnp.zeros((dim * 2,), jnp.float32)
                + 0.001 * jnp.arange(dim * 2, dtype=jnp.float32),
    }


if __name__ == "__main__":
    key = jax.random.PRNGKey(0)

    fwd_pallas = jax.jit(functools.partial(fsas_forward, use_pallas=True))
    fwd_ref = jax.jit(functools.partial(fsas_forward, use_pallas=False))

    # Main test: B=2, dim=4, 16x16 spatial (H, W multiples of patch_size=4).
    B, dim, H, W = 2, 4, 16, 16
    k0, k1, k2 = jax.random.split(key, 3)
    x = jax.random.normal(k0, (B, dim, H, W), dtype=jnp.float32)
    params = _make_params(k1, dim)

    y = jax.block_until_ready(fwd_pallas(x, params))
    y_ref = jax.block_until_ready(fwd_ref(x, params))
    assert y.shape == (B, dim, H, W)
    assert bool(jnp.all(jnp.isfinite(y)))
    assert jnp.allclose(y, y_ref, atol=1e-5, rtol=1e-4), float(
        jnp.max(jnp.abs(y - y_ref)))

    # Secondary test: spatial extent (12x12 -> H*W=144) not a multiple of 128,
    # single-batch; exercises the full-extent lane block path.
    B2, dim2, H2, W2 = 1, 8, 12, 12
    x2 = jax.random.normal(k2, (B2, dim2, H2, W2), dtype=jnp.float32)
    params2 = _make_params(jax.random.PRNGKey(1), dim2)
    y2 = jax.block_until_ready(fwd_pallas(x2, params2))
    y2_ref = jax.block_until_ready(fwd_ref(x2, params2))
    assert y2.shape == (B2, dim2, H2, W2)
    assert jnp.allclose(y2, y2_ref, atol=1e-5, rtol=1e-4), float(
        jnp.max(jnp.abs(y2 - y2_ref)))

    print("KERNEL_OK")
</pallas_src>

<mosaic_0001>
module attributes {stable_mosaic.version = 11 : i64} {
  func.func @_ln_mul_kernel(%arg0: i32, %arg1: i32, %arg2: memref<1x8x256xf32, #tpu.memory_space<vmem>>, %arg3: memref<1x8x256xf32, #tpu.memory_space<vmem>>, %arg4: memref<1x8x1xf32, #tpu.memory_space<vmem>>, %arg5: memref<1x8x1xf32, #tpu.memory_space<vmem>>, %arg6: memref<1x8x256xf32, #tpu.memory_space<vmem>>) attributes {dimension_semantics = [#tpu.dimension_semantics<parallel>, #tpu.dimension_semantics<parallel>], iteration_bounds = array<i64: 2, 1>, scalar_prefetch = 0 : i64, scratch_operands = 0 : i64, tpu.core_type = #tpu.core_type<tc>, window_params = [{transform_indices = @transform_0, window_bounds = array<i64: 1, 8, 256>}, {transform_indices = @transform_1, window_bounds = array<i64: 1, 8, 256>}, {pipeline_mode = #tpu.pipeline_mode<synchronous>, transform_indices = @transform_2, window_bounds = array<i64: 1, 8, 1>}, {pipeline_mode = #tpu.pipeline_mode<synchronous>, transform_indices = @transform_3, window_bounds = array<i64: 1, 8, 1>}, {transform_indices = @transform_4, window_bounds = array<i64: 1, 8, 256>}]} {
    %c0 = arith.constant 0 : index
    %c0_0 = arith.constant 0 : index
    %c0_1 = arith.constant 0 : index
    %0 = vector.load %arg2[%c0, %c0_0, %c0_1] : memref<1x8x256xf32, #tpu.memory_space<vmem>>, vector<1x8x256xf32>
    %cst = arith.constant dense<0.000000e+00> : vector<1x256xf32>
    %1 = vector.multi_reduction <add>, %0, %cst [1] : vector<1x8x256xf32> to vector<1x256xf32>
    %2 = vector.shape_cast %1 : vector<1x256xf32> to vector<1x1x256xf32>
    %cst_2 = arith.constant 1.250000e-01 : f32
    %3 = vector.broadcast %cst_2 : f32 to vector<1x1x256xf32>
    %4 = arith.mulf %2, %3 : vector<1x1x256xf32>
    %5 = vector.broadcast %4 : vector<1x1x256xf32> to vector<1x8x256xf32>
    %6 = arith.subf %0, %5 : vector<1x8x256xf32>
    %7 = arith.mulf %6, %6 : vector<1x8x256xf32>
    %cst_3 = arith.constant dense<0.000000e+00> : vector<1x256xf32>
    %8 = vector.multi_reduction <add>, %7, %cst_3 [1] : vector<1x8x256xf32> to vector<1x256xf32>
    %9 = vector.shape_cast %8 : vector<1x256xf32> to vector<1x1x256xf32>
    %cst_4 = arith.constant 1.250000e-01 : f32
    %10 = vector.broadcast %cst_4 : f32 to vector<1x1x256xf32>
    %11 = arith.mulf %9, %10 : vector<1x1x256xf32>
    %cst_5 = arith.constant 9.99999974E-6 : f32
    %12 = vector.broadcast %cst_5 : f32 to vector<1x1x256xf32>
    %13 = arith.addf %11, %12 : vector<1x1x256xf32>
    %14 = math.rsqrt %13 : vector<1x1x256xf32>
    %15 = vector.broadcast %14 : vector<1x1x256xf32> to vector<1x8x256xf32>
    %16 = arith.mulf %6, %15 : vector<1x8x256xf32>
    %c0_6 = arith.constant 0 : index
    %c0_7 = arith.constant 0 : index
    %c0_8 = arith.constant 0 : index
    %17 = vector.load %arg4[%c0_6, %c0_7, %c0_8] : memref<1x8x1xf32, #tpu.memory_space<vmem>>, vector<1x8x1xf32>
    %18 = vector.broadcast %17 : vector<1x8x1xf32> to vector<1x8x256xf32>
    %19 = arith.mulf %16, %18 : vector<1x8x256xf32>
    %c0_9 = arith.constant 0 : index
    %c0_10 = arith.constant 0 : index
    %c0_11 = arith.constant 0 : index
    %20 = vector.load %arg5[%c0_9, %c0_10, %c0_11] : memref<1x8x1xf32, #tpu.memory_space<vmem>>, vector<1x8x1xf32>
    %21 = vector.broadcast %20 : vector<1x8x1xf32> to vector<1x8x256xf32>
    %22 = arith.addf %19, %21 : vector<1x8x256xf32>
    %c0_12 = arith.constant 0 : index
    %c0_13 = arith.constant 0 : index
    %c0_14 = arith.constant 0 : index
    %23 = vector.load %arg3[%c0_12, %c0_13, %c0_14] : memref<1x8x256xf32, #tpu.memory_space<vmem>>, vector<1x8x256xf32>
    %24 = arith.mulf %22, %23 : vector<1x8x256xf32>
    %c0_15 = arith.constant 0 : index
    %c0_16 = arith.constant 0 : index
    %c0_17 = arith.constant 0 : index
    %25 = vector.load %arg6[%c0_15, %c0_16, %c0_17] : memref<1x8x256xf32, #tpu.memory_space<vmem>>, vector<1x8x256xf32>
    tpu.vector_store %arg6[%c0_15, %c0_16, %c0_17], %24 {strides = array<i32>} : memref<1x8x256xf32, #tpu.memory_space<vmem>>, vector<1x8x256xf32>,
    return
  }
  func.func @transform_0(%arg0: i32, %arg1: i32) -> (i32, i32, i32) {
    %c0_i32 = arith.constant 0 : i32
    %c0_i32_0 = arith.constant 0 : i32
    return %arg0, %c0_i32, %arg1 : i32, i32, i32
  }
  func.func @transform_1(%arg0: i32, %arg1: i32) -> (i32, i32, i32) {
    %c0_i32 = arith.constant 0 : i32
    %c0_i32_0 = arith.constant 0 : i32
    return %arg0, %c0_i32, %arg1 : i32, i32, i32
  }
  func.func @transform_2(%arg0: i32, %arg1: i32) -> (i32, i32, i32) {
    %c0_i32 = arith.constant 0 : i32
    %c0_i32_0 = arith.constant 0 : i32
    %c0_i32_1 = arith.constant 0 : i32
    %c0_i32_2 = arith.constant 0 : i32
    return %c0_i32, %c0_i32_0, %c0_i32_1 : i32, i32, i32
  }
  func.func @transform_3(%arg0: i32, %arg1: i32) -> (i32, i32, i32) {
    %c0_i32 = arith.constant 0 : i32
    %c0_i32_0 = arith.constant 0 : i32
    %c0_i32_1 = arith.constant 0 : i32
    %c0_i32_2 = arith.constant 0 : i32
    return %c0_i32, %c0_i32_0, %c0_i32_1 : i32, i32, i32
  }
  func.func @transform_4(%arg0: i32, %arg1: i32) -> (i32, i32, i32) {
    %c0_i32 = arith.constant 0 : i32
    %c0_i32_0 = arith.constant 0 : i32
    return %arg0, %c0_i32, %arg1 : i32, i32, i32
  }
}

</mosaic_0001>

<llo_original>
// kernel: fsas_forward.1
$region0: #{fsas_forward.1}
  #allocation0 [shape = 'u32[]', space=smem, size = 0x4, offset = 0x4, fixed_abs, tag = 'smem constant byte address 0x4 - core index']
  #allocation1 [shape = 'u32[144,128]{1,0:T(1,128)}', space=vmem, size = 0x12000, scoped, tag = 'internal scratch']
  %s0 = inlined_call_operand.vmem [shape: f32[2,8,256], index: 0, kind: input, shape index: {}]
  %s1 = inlined_call_operand.vmem [shape: f32[2,8,256], index: 1, kind: input, shape index: {}]
  %s2 = inlined_call_operand.vmem [shape: f32[1,8,1], index: 2, kind: input, shape index: {}]
  %s3 = inlined_call_operand.vmem [shape: f32[1,8,1], index: 3, kind: input, shape index: {}]
  %s4 = inlined_call_operand.vmem [shape: f32[2,8,256], index: 4, kind: output, shape index: {}]
  %s5 = sld [smem:[#allocation0]]
  $region49: #{fsas_forward.1} parent=0
    _
  %s7 = ssub.s32 1, %s5
  %s8 = scalar_select 0, %s7, %s5
  loop: start=0, step=1, limit=4
  $region2: #{fsas_forward.1} parent=0 // loop_pre_header
    _
  $region3: #{fsas_forward.1} parent=0 // loop_header
    %s10 = sphi 0, %s14
    %p11 = scmp.ge.s32.totalorder %s10, 4
    %s17 = sphi 0, %s29
    %s18 = sphi 0, %s25
    %s19 = sphi 0, %s17
    %s20 = sphi 0, %s18
    %s21 = sphi 0, %s19
    %s22 = sphi 0, %s20
    %s34 = sphi 0, %s36
    %s37 = sphi 0, %s34
    %s38 = sphi 0, %s37
    %s54 = sphi 0, %s38
    %s62 = sphi 0, %s64
    %s65 = sphi 0, %s62
    %s66 = sphi 0, %s65
    %s82 = sphi 0, %s66
    %s86 = sphi 0, %s86
    %s88 = sphi 0, %s86
    %s89 = sphi 0, %s88
    %s103 = sphi 0, %s89
    %s107 = sphi 0, %s107
    %s109 = sphi 0, %s107
    %s110 = sphi 0, %s109
    %s124 = sphi 0, %s110
    %s132 = sphi 0, %s134
    %s135 = sphi 0, %s132
    %s136 = sphi 0, %s135
    %s152 = sphi 0, %s136
  $region4: #{fsas_forward.1} parent=0 // loop_header_branch
    %13 = sbr.rel (%p11) target = $region8
  $region5: #{fsas_forward.1} parent=0 // loop_body
    %s15 = ssub.s32 %s10, 1
    %s16 = ssub.s32 %s10, 2
    %s23 = sadd.s32 1, %s18
    %p24 = scmp.ge.s32.totalorder %s23, 1
    %s25 = scalar_select %p24, 0, %s23
    %s26 = sadd.s32 1, %s17
    %s27 = scalar_select %p24, %s26, %s17
    %p28 = scmp.ge.s32.totalorder %s27, 2
    %s29 = scalar_select %p28, 0, %s27
    %s30 = ssub.s32 %s17, %s29
    %s31 = ssub.s32 %s18, %s25
    %s32 = sor.u32 %s30, %s31
    %p33 = scmp.eq.s32.totalorder %s32, 0
    %s35 = sadd.s32 %s34, 1
    %s36 = scalar_select %p33, %s34, %s35
    %p39 = pneg %p33
    %p40 = scmp.eq.s32.totalorder %s10, 1
    %p41 = por %p39, %p40
    %p42 = scmp.ne.s32.totalorder %s34, %s37
    %p43 = scmp.eq.s32.totalorder %s10, 0
    %p44 = por %p42, %p43
    %p45 = scmp.ne.s32.totalorder %s34, %s37
    %p46 = scmp.eq.s32.totalorder %s15, 1
    %p47 = por %p45, %p46
    %p48 = scmp.ne.s32.totalorder %s37, %s38
    %p49 = scmp.eq.s32.totalorder %s15, 0
    %p50 = por %p48, %p49
    %p51 = scmp.ne.s32.totalorder %s37, %s38
    %p52 = scmp.eq.s32.totalorder %s16, 1
    %p53 = por %p51, %p52
    %p55 = scmp.ne.s32.totalorder %s38, %s54
    %p56 = scmp.eq.s32.totalorder %s16, 0
    %p57 = por %p55, %p56
    %s58 = ssub.s32 %s17, %s29
    %s59 = ssub.s32 %s18, %s25
    %s60 = sor.u32 %s58, %s59
    %p61 = scmp.eq.s32.totalorder %s60, 0
    %s63 = sadd.s32 %s62, 1
    %s64 = scalar_select %p61, %s62, %s63
    %p67 = pneg %p61
    %p68 = scmp.eq.s32.totalorder %s10, 1
    %p69 = por %p67, %p68
    %p70 = scmp.ne.s32.totalorder %s62, %s65
    %p71 = scmp.eq.s32.totalorder %s10, 0
    %p72 = por %p70, %p71
    %p73 = scmp.ne.s32.totalorder %s62, %s65
    %p74 = scmp.eq.s32.totalorder %s15, 1
    %p75 = por %p73, %p74
    %p76 = scmp.ne.s32.totalorder %s65, %s66
    %p77 = scmp.eq.s32.totalorder %s15, 0
    %p78 = por %p76, %p77
    %p79 = scmp.ne.s32.totalorder %s65, %s66
    %p80 = scmp.eq.s32.totalorder %s16, 1
    %p81 = por %p79, %p80
    %p83 = scmp.ne.s32.totalorder %s66, %s82
    %p84 = scmp.eq.s32.totalorder %s16, 0
    %p85 = por %p83, %p84
    %s87 = sadd.s32 %s86, 1
    %p90 = scmp.eq.s32.totalorder %s10, 1
    %p91 = scmp.ne.s32.totalorder %s86, %s88
    %p92 = scmp.eq.s32.totalorder %s10, 0
    %p93 = por %p91, %p92
    %p94 = scmp.ne.s32.totalorder %s86, %s88
    %p95 = scmp.eq.s32.totalorder %s15, 1
    %p96 = por %p94, %p95
    %p97 = scmp.ne.s32.totalorder %s88, %s89
    %p98 = scmp.eq.s32.totalorder %s15, 0
    %p99 = por %p97, %p98
    %p100 = scmp.ne.s32.totalorder %s88, %s89
    %p101 = scmp.eq.s32.totalorder %s16, 1
    %p102 = por %p100, %p101
    %p104 = scmp.ne.s32.totalorder %s89, %s103
    %p105 = scmp.eq.s32.totalorder %s16, 0
    %p106 = por %p104, %p105
    %s108 = sadd.s32 %s107, 1
    %p111 = scmp.eq.s32.totalorder %s10, 1
    %p112 = scmp.ne.s32.totalorder %s107, %s109
    %p113 = scmp.eq.s32.totalorder %s10, 0
    %p114 = por %p112, %p113
    %p115 = scmp.ne.s32.totalorder %s107, %s109
    %p116 = scmp.eq.s32.totalorder %s15, 1
    %p117 = por %p115, %p116
    %p118 = scmp.ne.s32.totalorder %s109, %s110
    %p119 = scmp.eq.s32.totalorder %s15, 0
    %p120 = por %p118, %p119
    %p121 = scmp.ne.s32.totalorder %s109, %s110
    %p122 = scmp.eq.s32.totalorder %s16, 1
    %p123 = por %p121, %p122
    %p125 = scmp.ne.s32.totalorder %s110, %s124
    %p126 = scmp.eq.s32.totalorder %s16, 0
    %p127 = por %p125, %p126
    %s128 = ssub.s32 %s17, %s29
    %s129 = ssub.s32 %s18, %s25
    %s130 = sor.u32 %s128, %s129
    %p131 = scmp.eq.s32.totalorder %s130, 0
    %s133 = sadd.s32 %s132, 1
    %s134 = scalar_select %p131, %s132, %s133
    %p137 = pneg %p131
    %p138 = scmp.eq.s32.totalorder %s10, 1
    %p139 = por %p137, %p138
    %p140 = scmp.ne.s32.totalorder %s132, %s135
    %p141 = scmp.eq.s32.totalorder %s10, 0
    %p142 = por %p140, %p141
    %p143 = scmp.ne.s32.totalorder %s132, %s135
    %p144 = scmp.eq.s32.totalorder %s15, 1
    %p145 = por %p143, %p144
    %p146 = scmp.ne.s32.totalorder %s135, %s136
    %p147 = scmp.eq.s32.totalorder %s15, 0
    %p148 = por %p146, %p147
    %p149 = scmp.ne.s32.totalorder %s135, %s136
    %p150 = scmp.eq.s32.totalorder %s16, 1
    %p151 = por %p149, %p150
    %p153 = scmp.ne.s32.totalorder %s136, %s152
    %p154 = scmp.eq.s32.totalorder %s16, 0
    %p155 = por %p153, %p154
    %p156 = scmp.le.s32.totalorder 1, %s10
    %p157 = scmp.lt.s32.totalorder %s10, 3
    %p158 = pnand %p156, %p157
    %p159 = pneg %p158
    // Predicated region
    $region9: #{fsas_forward.1} parent=5 // pred_check
      _
    $region10: #{fsas_forward.1} parent=5 // pred_check_branch
      %161 = sbr.rel (%p158) target = $region12
    $region11: #{fsas_forward.1} parent=5 // pred_region
      %s162 = ssub.s32 %s10, 1
      // Predicated region
      $region13: #{fsas_forward.1} parent=11 // pred_check
        %p163 = pneg %p99
      $region14: #{fsas_forward.1} parent=11 // pred_check_branch
        %165 = sbr.rel (%p163) target = $region16
      $region15: #{fsas_forward.1} parent=11 // pred_region
        _
      $region16: #{fsas_forward.1} parent=11 // pred_fallthru
        _
      // Predicated region
      $region17: #{fsas_forward.1} parent=11 // pred_check
        %p166 = pneg %p120
      $region18: #{fsas_forward.1} parent=11 // pred_check_branch
        %168 = sbr.rel (%p166) target = $region20
      $region19: #{fsas_forward.1} parent=11 // pred_region
        _
      $region20: #{fsas_forward.1} parent=11 // pred_fallthru
        _
    $region12: #{fsas_forward.1} parent=5 // pred_fallthru
      _
    %p169 = scmp.lt.s32.totalorder %s10, 2
    // Predicated region
    $region21: #{fsas_forward.1} parent=5 // pred_check
      %p170 = pneg %p169
    $region22: #{fsas_forward.1} parent=5 // pred_check_branch
      %172 = sbr.rel (%p170) target = $region24
    $region23: #{fsas_forward.1} parent=5 // pred_region
      // Predicated region
      $region25: #{fsas_forward.1} parent=23 // pred_check
        %p173 = pneg %p44
      $region26: #{fsas_forward.1} parent=23 // pred_check_branch
        %175 = sbr.rel (%p173) target = $region28
      $region27: #{fsas_forward.1} parent=23 // pred_region
        %s176 = smul.u32 2, %s18
        %p177 = scmp.lt.s32.totalorder %s17, 1
        %s178 = scalar_select %p177, %s17, 1
        %p179 = scmp.lt.s32.totalorder %s176, 1
        %s180 = scalar_select %p179, %s176, 1
        %s181 = smul.addr %s178, 2
        %s182 = sadd.s32 %s180, %s181
        %s183 = smul.addr %s182, 8
        %s184 = scalar_lea.vmem %s0, %s183
        %s185 = smul.u32 2, %s18
      $region28: #{fsas_forward.1} parent=23 // pred_fallthru
        _
      // Predicated region
      $region29: #{fsas_forward.1} parent=23 // pred_check
        %p186 = pneg %p72
      $region30: #{fsas_forward.1} parent=23 // pred_check_branch
        %188 = sbr.rel (%p186) target = $region32
      $region31: #{fsas_forward.1} parent=23 // pred_region
        %s189 = smul.u32 2, %s18
        %p190 = scmp.lt.s32.totalorder %s17, 1
        %s191 = scalar_select %p190, %s17, 1
        %p192 = scmp.lt.s32.totalorder %s189, 1
        %s193 = scalar_select %p192, %s189, 1
        %s194 = smul.addr %s191, 2
        %s195 = sadd.s32 %s193, %s194
        %s196 = smul.addr %s195, 8
        %s197 = scalar_lea.vmem %s1, %s196
        %s198 = smul.u32 2, %s18
      $region32: #{fsas_forward.1} parent=23 // pred_fallthru
        _
    $region24: #{fsas_forward.1} parent=5 // pred_fallthru
      _
    %p199 = scmp.le.s32.totalorder 1, %s10
    %p200 = scmp.lt.s32.totalorder %s10, 3
    %p201 = pnand %p199, %p200
    %p202 = pneg %p201
    // Predicated region
    $region33: #{fsas_forward.1} parent=5 // pred_check
      _
    $region34: #{fsas_forward.1} parent=5 // pred_check_branch
      %204 = sbr.rel (%p201) target = $region36
    $region35: #{fsas_forward.1} parent=5 // pred_region
      %s205 = ssub.s32 %s10, 1
      %s206 = smul.u32 2, %s20
      %p207 = scmp.lt.s32.totalorder %s19, 1
      %s208 = scalar_select %p207, %s19, 1
      %p209 = scmp.lt.s32.totalorder %s206, 1
      %s210 = scalar_select %p209, %s206, 1
      %s211 = smul.addr %s208, 2
      %s212 = sadd.s32 %s210, %s211
      %s213 = smul.addr %s212, 8
      %s214 = scalar_lea.vmem %s0, %s213
      %p215 = pneg %p50
      %p216 = pneg %p47
      %s217 = smul.u32 2, %s20
      %p218 = scmp.lt.s32.totalorder %s19, 1
      %s219 = scalar_select %p218, %s19, 1
      %p220 = scmp.lt.s32.totalorder %s217, 1
      %s221 = scalar_select %p220, %s217, 1
      %s222 = smul.addr %s219, 2
      %s223 = sadd.s32 %s221, %s222
      %s224 = smul.addr %s223, 8
      %s225 = scalar_lea.vmem %s1, %s224
      %p226 = pneg %p78
      %p227 = pneg %p75
      %p228 = pneg %p99
      %p229 = pneg %p96
      %p230 = pneg %p120
      %p231 = pneg %p117
      %p232 = pneg %p148
      %p233 = pneg %p145
      %s234 = smul.u32 2, %s20
      %p235 = scmp.lt.s32.totalorder %s19, 1
      %s236 = scalar_select %p235, %s19, 1
      %p237 = scmp.lt.s32.totalorder %s234, 1
      %s238 = scalar_select %p237, %s234, 1
      %s239 = smul.addr %s236, 2
      %s240 = sadd.s32 %s238, %s239
      %s241 = smul.addr %s240, 8
      %s242 = scalar_lea.vmem %s4, %s241
      %s243 = smul.u32 2, %s20
      %p244 = scmp.lt.s32.totalorder %s19, 1
      %s245 = scalar_select %p244, %s19, 1
      %p246 = scmp.lt.s32.totalorder %s243, 1
      %s247 = scalar_select %p246, %s243, 1
      %s248 = smul.addr %s245, 2
      %s249 = sadd.s32 %s247, %s248
      %s250 = smul.addr %s249, 8
      %s251 = scalar_lea.vmem %s0, %s250
      %s252 = smul.u32 2, %s20
      %s253 = smul.u32 2, %s20
      %p254 = scmp.lt.s32.totalorder %s19, 1
      %s255 = scalar_select %p254, %s19, 1
      %p256 = scmp.lt.s32.totalorder %s253, 1
      %s257 = scalar_select %p256, %s253, 1
      %s258 = smul.addr %s255, 2
      %s259 = sadd.s32 %s257, %s258
      %s260 = smul.addr %s259, 8
      %s261 = scalar_lea.vmem %s1, %s260
      %s262 = smul.u32 2, %s20
      %s263 = smul.u32 2, %s20
      %p264 = scmp.lt.s32.totalorder %s19, 1
      %s265 = scalar_select %p264, %s19, 1
      %p266 = scmp.lt.s32.totalorder %s263, 1
      %s267 = scalar_select %p266, %s263, 1
      %s268 = smul.addr %s265, 2
      %s269 = sadd.s32 %s267, %s268
      %s270 = smul.addr %s269, 8
      %s271 = scalar_lea.vmem %s4, %s270
      %s272 = smul.u32 2, %s20
      %v273 = vld [vmem:[%s251] sm:$0xff]
      %v274 = vld [vmem:[%s251 + $0x8] sm:$0xff]
      %v275 = vrot.slane %v273, 4
      %v276 = vadd.f32 %v273, %v275
      %v277 = vrot.slane %v276, 2
      %v278 = vadd.f32 %v276, %v277
      %v279 = vrot.slane %v278, 1
      %v280 = vadd.f32 %v278, %v279
      %v281 = vrot.slane %v274, 4
      %v282 = vadd.f32 %v274, %v281
      %v283 = vrot.slane %v282, 2
      %v284 = vadd.f32 %v282, %v283
      %v285 = vrot.slane %v284, 1
      %v286 = vadd.f32 %v284, %v285
      %v287 = vmul.f32 %v280, 0.125
      %v288 = vmul.f32 %v286, 0.125
      %v289 = vsub.f32 %v273, %v287
      %v290 = vsub.f32 %v274, %v288
      %v291 = vmul.f32 %v289, %v289
      %v292 = vmul.f32 %v290, %v290
      %v293 = vrot.slane %v291, 4
      %v294 = vadd.f32 %v291, %v293
      %v295 = vrot.slane %v294, 2
      %v296 = vadd.f32 %v294, %v295
      %v297 = vrot.slane %v296, 1
      %v298 = vadd.f32 %v296, %v297
      %v299 = vrot.slane %v292, 4
      %v300 = vadd.f32 %v292, %v299
      %v301 = vrot.slane %v300, 2
      %v302 = vadd.f32 %v300, %v301
      %v303 = vrot.slane %v302, 1
      %v304 = vadd.f32 %v302, %v303
      %v305 = vmul.f32 %v298, 0.125
      %v306 = vmul.f32 %v304, 0.125
      %v307 = vadd.f32 %v305, 1e-05
      %v308 = vadd.f32 %v306, 1e-05
      %v309 = vrsqrt.pop %v307
      %v310 = vrsqrt.pop %v308
      %v311 = vmul.f32 %v289, %v309
      %v312 = vmul.f32 %v290, %v310
      %v313 = vld [vmem:[%s2] sm:$0xff]
      %315 = vset.pattern.permute.xlu0 0
      %316 = vperm.xlu0 %315, %v313
      %v317 = vpop.permute.xlu0 %316
      %v319 = vmul.f32 %v311, %v317
      %v320 = vmul.f32 %v312, %v317
      %v321 = vld [vmem:[%s3] sm:$0xff]
      %323 = vset.pattern.permute.xlu0 0
      %324 = vperm.xlu0 %323, %v321
      %v325 = vpop.permute.xlu0 %324
      %v327 = vadd.f32 %v319, %v325
      %v328 = vadd.f32 %v320, %v325
      %v329 = vld [vmem:[%s261] sm:$0xff]
      %v330 = vld [vmem:[%s261 + $0x8] sm:$0xff]
      %v331 = vmul.f32 %v327, %v329
      %v332 = vmul.f32 %v328, %v330
      %333 = vst [vmem:[%s271] sm:$0xff] %v331
      %334 = vst [vmem:[%s271 + $0x8] sm:$0xff] %v332
      %s335 = smul.u32 2, %s20
      %p336 = scmp.lt.s32.totalorder %s19, 1
      %s337 = scalar_select %p336, %s19, 1
      %p338 = scmp.lt.s32.totalorder %s335, 1
      %s339 = scalar_select %p338, %s335, 1
      %s340 = smul.addr %s337, 2
      %s341 = sadd.s32 %s339, %s340
      %s342 = smul.addr %s341, 8
      %s343 = scalar_lea.vmem %s4, %s342
      // Predicated region
      $region37: #{fsas_forward.1} parent=35 // pred_check
        %p344 = pneg %p145
      $region38: #{fsas_forward.1} parent=35 // pred_check_branch
        %346 = sbr.rel (%p344) target = $region40
      $region39: #{fsas_forward.1} parent=35 // pred_region
        %s347 = smul.u32 2, %s20
      $region40: #{fsas_forward.1} parent=35 // pred_fallthru
        _
    $region36: #{fsas_forward.1} parent=5 // pred_fallthru
      _
    %p348 = scmp.le.s32.totalorder 2, %s10
    // Predicated region
    $region41: #{fsas_forward.1} parent=5 // pred_check
      %p349 = pneg %p348
    $region42: #{fsas_forward.1} parent=5 // pred_check_branch
      %351 = sbr.rel (%p349) target = $region44
    $region43: #{fsas_forward.1} parent=5 // pred_region
      %s352 = ssub.s32 %s10, 2
      // Predicated region
      $region45: #{fsas_forward.1} parent=43 // pred_check
        %p353 = pneg %p151
      $region46: #{fsas_forward.1} parent=43 // pred_check_branch
        %355 = sbr.rel (%p353) target = $region48
      $region47: #{fsas_forward.1} parent=43 // pred_region
        %s356 = smul.u32 2, %s22
        %p357 = scmp.lt.s32.totalorder %s21, 1
        %s358 = scalar_select %p357, %s21, 1
        %p359 = scmp.lt.s32.totalorder %s356, 1
        %s360 = scalar_select %p359, %s356, 1
        %s361 = smul.addr %s358, 2
        %s362 = sadd.s32 %s360, %s361
        %s363 = smul.addr %s362, 8
        %s364 = scalar_lea.vmem %s4, %s363
      $region48: #{fsas_forward.1} parent=43 // pred_fallthru
        _
    $region44: #{fsas_forward.1} parent=5 // pred_fallthru
      _
  $region6: #{fsas_forward.1} parent=0 // loop_footer
    %s14 = sadd.s32 1, %s10
  $region7: #{fsas_forward.1} parent=0 // loop_footer_branch
    %9 = sbr.rel target = $region3
  $region8: #{fsas_forward.1} parent=0 // loop_exit
    _

</llo_original>
